<compile_context>
chip_gen: v6e
topology: v6e:2x2x1
jax: 0.10.0
libtpu: 0.0.40
codegen_flags: <defaults>
</compile_context>

<pallas_src>
import functools

import jax
import jax.numpy as jnp
from jax.experimental import pallas as pl
from jax.experimental.pallas import tpu as pltpu


# ---------------------------------------------------------------------------
# Kernel: whole 4-layer MLP fused, one batch tile per grid step.
# ---------------------------------------------------------------------------
def _mlp_kernel(x_ref, w1_ref, b1_ref, w2_ref, b2_ref,
                w3_ref, b3_ref, w4_ref, b4_ref, o_ref):
    # Linear(F, 1024) + ReLU   (bf16 MXU matmul, f32 accumulate / epilogue).
    h = jnp.dot(x_ref[...], w1_ref[...], preferred_element_type=jnp.float32)
    h = jnp.maximum(h + b1_ref[...], 0.0)
    # Linear(1024, 256) + ReLU
    h = jnp.dot(h.astype(jnp.bfloat16), w2_ref[...],
                preferred_element_type=jnp.float32)
    h = jnp.maximum(h + b2_ref[...], 0.0)
    # Linear(256, 64) + ReLU
    h = jnp.dot(h.astype(jnp.bfloat16), w3_ref[...],
                preferred_element_type=jnp.float32)
    h = jnp.maximum(h + b3_ref[...], 0.0)
    # Linear(64, 1): N=1 would waste 127/128 MXU lanes -> VPU mul + lane
    # reduce.  (A lane-dense (1, tile) output layout was considered but the
    # win is tiny here -- 4 output bytes per row -- and it adds an XLU
    # transpose per step.)
    y = jnp.sum(h * w4_ref[...], axis=-1, keepdims=True) + b4_ref[...]
    o_ref[...] = y.astype(o_ref.dtype)


# ---------------------------------------------------------------------------
# One-time, cached hardware / capability detection (kept out of the hot path).
# ---------------------------------------------------------------------------
@functools.lru_cache(maxsize=None)
def _tpu_config():
    """(num_tensorcores, vmem_limit_clamp_bytes) for the local TPU."""
    try:
        kind = jax.devices()[0].device_kind.lower()
    except Exception:  # no device info -> conservative defaults
        kind = ""
    if "7" in kind:
        # v7x: 2 TensorCores/chip, 64 MiB VMEM per core -> leave headroom.
        return 2, 48 << 20
    if "v5" in kind or "v6" in kind:
        # v5e / v6e: single TensorCore, 128 MiB VMEM.
        return 1, 100 << 20
    return 1, 56 << 20  # unknown chip: conservative


_SINGLE_BUFFER_OK = None


def _single_buffer_supported():
    """One-time capability probe: can grid-invariant inputs use pl.Buffered(1)?

    Probes via AOT lower+compile on abstract shapes (no execution) and caches
    the answer.  The broad except is intentional: this is a pure capability
    probe and the fallback (default double-buffering) is always correct.
    """
    global _SINGLE_BUFFER_OK
    if _SINGLE_BUFFER_OK is None:
        try:
            def _probe_kernel(x_ref, w_ref, o_ref):
                o_ref[...] = x_ref[...] + w_ref[...]

            probe = pl.pallas_call(
                _probe_kernel,
                out_shape=jax.ShapeDtypeStruct((16, 128), jnp.float32),
                grid_spec=pltpu.PrefetchScalarGridSpec(
                    num_scalar_prefetch=0,
                    grid=(2,),
                    in_specs=[
                        pl.BlockSpec((8, 128), lambda i: (i, 0)),
                        pl.BlockSpec((8, 128), lambda i: (0, 0),
                                     pipeline_mode=pl.Buffered(1)),
                    ],
                    out_specs=pl.BlockSpec((8, 128), lambda i: (i, 0)),
                ),
            )
            jax.jit(probe).lower(
                jax.ShapeDtypeStruct((16, 128), jnp.float32),
                jax.ShapeDtypeStruct((8, 128), jnp.float32),
            ).compile()
            _SINGLE_BUFFER_OK = True
        except Exception:
            _SINGLE_BUFFER_OK = False
    return _SINGLE_BUFFER_OK


# ---------------------------------------------------------------------------
# Tiling / pallas_call plumbing.
# ---------------------------------------------------------------------------
def _round_up(n, m):
    return (int(n) + m - 1) // m * m


# (tile, 1024+1024+256+64) f32 intermediates at tile=1024 ~= 9.5 MiB: fits
# even v7x's 64 MiB VMEM with room to spare.
_MAX_BATCH_TILE = 1024


def _pick_batch_tile(batch, num_tc):
    if num_tc <= 1:
        # Single TensorCore (v5e/v6e): the grid is a serial loop, so take one
        # maximal tile -- splitting only adds ~0.35us/step of fixed overhead.
        return min(_MAX_BATCH_TILE, _round_up(batch, 16))
    # v7x (2 TensorCores): split into >= 2 steps so both cores get work,
    # unless the batch is too small to be worth splitting.
    if batch <= 32:
        return _round_up(batch, 16)
    return min(_MAX_BATCH_TILE, _round_up(pl.cdiv(batch, 2), 16))


def _forward_call(x, flat, batch_tile, single_buffer, vmem_clamp):
    B, F = x.shape
    w1, b1, w2, b2, w3, b3, w4, b4 = flat

    # VMEM budget: resident weights (x2 if Buffered(1) is unavailable),
    # double-buffered bf16 x / f32 out tiles, f32 activations with a 2x
    # margin, plus fixed headroom; clamped per-chip.
    bytes_weights = sum(int(a.size) * a.dtype.itemsize for a in flat)
    weight_bufs = 1 if single_buffer else 2
    bytes_io = 2 * batch_tile * (F * 2 + 4)
    bytes_inter = batch_tile * (1024 + 1024 + 256 + 64) * 4
    budget = weight_bufs * bytes_weights + bytes_io + 2 * bytes_inter + (8 << 20)
    vmem_limit = int(min(max(budget, 32 << 20), vmem_clamp))
    # NOTE: for very wide inputs (w1 bf16 = F*1024*2 bytes approaching the
    # clamp) the weights-resident design stops fitting v7x's 64 MiB VMEM; a
    # K-tiled reduction grid axis for layer 1 would be needed in that regime.

    def inv_spec(shape):
        index_map = lambda i, _n=len(shape): (0,) * _n
        if single_buffer:
            # Grid-invariant block: one VMEM buffer is enough; the default
            # double-buffering is pure VMEM waste for constant index maps.
            return pl.BlockSpec(shape, index_map, pipeline_mode=pl.Buffered(1))
        return pl.BlockSpec(shape, index_map)

    return pl.pallas_call(
        _mlp_kernel,
        out_shape=jax.ShapeDtypeStruct((B, 1), jnp.float32),
        grid_spec=pltpu.PrefetchScalarGridSpec(
            num_scalar_prefetch=0,
            grid=(B // batch_tile,),
            in_specs=[
                pl.BlockSpec((batch_tile, F), lambda i: (i, 0)),   # x tile
                inv_spec(w1.shape), inv_spec(b1.shape),
                inv_spec(w2.shape), inv_spec(b2.shape),
                inv_spec(w3.shape), inv_spec(b3.shape),
                inv_spec(w4.shape), inv_spec(b4.shape),
            ],
            out_specs=pl.BlockSpec((batch_tile, 1), lambda i: (i, 0)),
        ),
        compiler_params=pltpu.CompilerParams(
            dimension_semantics=("parallel",),
            vmem_limit_bytes=vmem_limit,
        ),
    )(x, w1, b1, w2, b2, w3, b3, w4, b4)


def regression_model_forward(x, flat_params, *, batch_tile=None):
    """x: (B, F) float -> (B, 1) float32.  Pure / jit-able; whole MLP fused."""
    B, _ = x.shape
    num_tc, vmem_clamp = _tpu_config()
    single_buffer = _single_buffer_supported()

    if batch_tile is None:
        batch_tile = _pick_batch_tile(B, num_tc)
    batch_tile = max(16, _round_up(batch_tile, 16))    # bf16 sublane packing

    steps = pl.cdiv(B, batch_tile)
    if num_tc >= 2 and steps > 1 and steps % 2 == 1:
        steps += 1    # even step count -> balanced work across v7x's 2 TCs
    b_pad = steps * batch_tile

    # bf16 x: half the per-step HBM->VMEM DMA, no in-kernel convert.  Padded
    # rows (zeros) are computed (cheap, finite) and sliced off below.
    x_bf16 = x.astype(jnp.bfloat16)
    if b_pad != B:
        x_bf16 = jnp.pad(x_bf16, ((0, b_pad - B), (0, 0)))

    out = _forward_call(x_bf16, flat_params, batch_tile, single_buffer,
                        vmem_clamp)
    return out[:B]


# ---------------------------------------------------------------------------
# Parameters / reference.
# ---------------------------------------------------------------------------
def init_params(key, input_features):
    """Deterministic init mirroring nn.Linear shapes (stored as (in, out))."""
    dims = [(input_features, 1024), (1024, 256), (256, 64), (64, 1)]
    params = []
    for fan_in, fan_out in dims:
        key, kw, kb = jax.random.split(key, 3)
        bound = 1.0 / jnp.sqrt(fan_in)
        w = jax.random.uniform(kw, (fan_in, fan_out), jnp.float32, -bound, bound)
        b = jax.random.uniform(kb, (1, fan_out), jnp.float32, -bound, bound)
        params.append((w, b))
    return params


def prepare_params(params):
    """One-time conversion to the kernel's resident layout (hoisted out of the
    forward pass): w1..w3 bf16, biases f32 (1, out), w4 as an f32 (1, 64) row."""
    (w1, b1), (w2, b2), (w3, b3), (w4, b4) = params
    return (
        jnp.asarray(w1, jnp.bfloat16), jnp.asarray(b1, jnp.float32).reshape(1, -1),
        jnp.asarray(w2, jnp.bfloat16), jnp.asarray(b2, jnp.float32).reshape(1, -1),
        jnp.asarray(w3, jnp.bfloat16), jnp.asarray(b3, jnp.float32).reshape(1, -1),
        jnp.asarray(w4, jnp.float32).reshape(1, -1),
        jnp.asarray(b4, jnp.float32).reshape(1, -1),
    )


def reference_forward(x, params):
    """Pure-JAX reference mirroring the kernel's bf16-matmul / f32-accumulate.
    (Deviates from strict f32 torch Linear only by bf16 MXU quantization.)"""
    (w1, b1), (w2, b2), (w3, b3), (w4, b4) = params
    h = x
    for w, b in ((w1, b1), (w2, b2), (w3, b3)):
        h = jnp.dot(h.astype(jnp.bfloat16), w.astype(jnp.bfloat16),
                    preferred_element_type=jnp.float32)
        h = jnp.maximum(h + b, 0.0)
    return jnp.sum(h * w4.reshape(1, -1), axis=-1, keepdims=True) + b4


if __name__ == "__main__":
    key = jax.random.PRNGKey(0)
    k_x, k_p = jax.random.split(key)

    input_features = 32
    params = init_params(k_p, input_features)
    flat = prepare_params(params)          # bf16 casts hoisted, done once

    # Populate the one-time caches eagerly (outside of any jit trace).
    _tpu_config()
    _single_buffer_supported()

    fwd = jax.jit(regression_model_forward)

    # Small smoke tests: a multiple-of-16 batch, an odd batch (padding path),
    # and a batch that exercises >1 grid step on a 2-TensorCore chip.
    for batch in (16, 5, 40):
        x = jax.random.normal(k_x, (batch, input_features), jnp.float32)
        out = jax.block_until_ready(fwd(x, flat))
        ref = reference_forward(x, params)
        assert out.shape == (batch, 1)
        assert jnp.allclose(out, ref, atol=5e-3, rtol=5e-3), float(
            jnp.max(jnp.abs(out - ref)))

    print("KERNEL_OK")
</pallas_src>

<mosaic_0001>
module attributes {stable_mosaic.version = 11 : i64} {
  func.func @_mlp_kernel(%arg0: i32, %arg1: memref<16x32xbf16, #tpu.memory_space<vmem>>, %arg2: memref<32x1024xbf16, #tpu.memory_space<vmem>>, %arg3: memref<1x1024xf32, #tpu.memory_space<vmem>>, %arg4: memref<1024x256xbf16, #tpu.memory_space<vmem>>, %arg5: memref<1x256xf32, #tpu.memory_space<vmem>>, %arg6: memref<256x64xbf16, #tpu.memory_space<vmem>>, %arg7: memref<1x64xf32, #tpu.memory_space<vmem>>, %arg8: memref<1x64xf32, #tpu.memory_space<vmem>>, %arg9: memref<1x1xf32, #tpu.memory_space<vmem>>, %arg10: memref<16x1xf32, #tpu.memory_space<vmem>>) attributes {dimension_semantics = [#tpu.dimension_semantics<parallel>], iteration_bounds = array<i64: 1>, scalar_prefetch = 0 : i64, scratch_operands = 0 : i64, tpu.core_type = #tpu.core_type<tc>, window_params = [{transform_indices = @transform_0, window_bounds = array<i64: 16, 32>}, {pipeline_mode = #tpu.pipeline_mode<synchronous>, transform_indices = @transform_1, window_bounds = array<i64: 32, 1024>}, {pipeline_mode = #tpu.pipeline_mode<synchronous>, transform_indices = @transform_2, window_bounds = array<i64: 1, 1024>}, {pipeline_mode = #tpu.pipeline_mode<synchronous>, transform_indices = @transform_3, window_bounds = array<i64: 1024, 256>}, {pipeline_mode = #tpu.pipeline_mode<synchronous>, transform_indices = @transform_4, window_bounds = array<i64: 1, 256>}, {pipeline_mode = #tpu.pipeline_mode<synchronous>, transform_indices = @transform_5, window_bounds = array<i64: 256, 64>}, {pipeline_mode = #tpu.pipeline_mode<synchronous>, transform_indices = @transform_6, window_bounds = array<i64: 1, 64>}, {pipeline_mode = #tpu.pipeline_mode<synchronous>, transform_indices = @transform_7, window_bounds = array<i64: 1, 64>}, {pipeline_mode = #tpu.pipeline_mode<synchronous>, transform_indices = @transform_8, window_bounds = array<i64: 1, 1>}, {transform_indices = @transform_9, window_bounds = array<i64: 16, 1>}]} {
    %c0 = arith.constant 0 : index
    %c0_0 = arith.constant 0 : index
    %0 = vector.load %arg1[%c0, %c0_0] : memref<16x32xbf16, #tpu.memory_space<vmem>>, vector<16x32xbf16>
    %c0_1 = arith.constant 0 : index
    %c0_2 = arith.constant 0 : index
    %1 = vector.load %arg2[%c0_1, %c0_2] : memref<32x1024xbf16, #tpu.memory_space<vmem>>, vector<32x1024xbf16>
    %cst = arith.constant dense<0.000000e+00> : vector<16x1024xf32>
    %2 = tpu.matmul %0, %1, %cst {dimension_numbers = #tpu.dot_dimension_numbers<[1], [0], [0], [1], [0, 0, 1, 1], [], []>} : vector<16x32xbf16>, vector<32x1024xbf16>, vector<16x1024xf32> -> vector<16x1024xf32>
    %c0_3 = arith.constant 0 : index
    %c0_4 = arith.constant 0 : index
    %3 = vector.load %arg3[%c0_3, %c0_4] : memref<1x1024xf32, #tpu.memory_space<vmem>>, vector<1x1024xf32>
    %4 = vector.broadcast %3 : vector<1x1024xf32> to vector<16x1024xf32>
    %5 = arith.addf %2, %4 : vector<16x1024xf32>
    %cst_5 = arith.constant 0.000000e+00 : f32
    %6 = vector.broadcast %cst_5 : f32 to vector<16x1024xf32>
    %7 = arith.maximumf %5, %6 : vector<16x1024xf32>
    %8 = arith.truncf %7 : vector<16x1024xf32> to vector<16x1024xbf16>
    %c0_6 = arith.constant 0 : index
    %c0_7 = arith.constant 0 : index
    %9 = vector.load %arg4[%c0_6, %c0_7] : memref<1024x256xbf16, #tpu.memory_space<vmem>>, vector<1024x256xbf16>
    %cst_8 = arith.constant dense<0.000000e+00> : vector<16x256xf32>
    %10 = tpu.matmul %8, %9, %cst_8 {dimension_numbers = #tpu.dot_dimension_numbers<[1], [0], [0], [1], [0, 0, 1, 1], [], []>} : vector<16x1024xbf16>, vector<1024x256xbf16>, vector<16x256xf32> -> vector<16x256xf32>
    %c0_9 = arith.constant 0 : index
    %c0_10 = arith.constant 0 : index
    %11 = vector.load %arg5[%c0_9, %c0_10] : memref<1x256xf32, #tpu.memory_space<vmem>>, vector<1x256xf32>
    %12 = vector.broadcast %11 : vector<1x256xf32> to vector<16x256xf32>
    %13 = arith.addf %10, %12 : vector<16x256xf32>
    %cst_11 = arith.constant 0.000000e+00 : f32
    %14 = vector.broadcast %cst_11 : f32 to vector<16x256xf32>
    %15 = arith.maximumf %13, %14 : vector<16x256xf32>
    %16 = arith.truncf %15 : vector<16x256xf32> to vector<16x256xbf16>
    %c0_12 = arith.constant 0 : index
    %c0_13 = arith.constant 0 : index
    %17 = vector.load %arg6[%c0_12, %c0_13] : memref<256x64xbf16, #tpu.memory_space<vmem>>, vector<256x64xbf16>
    %cst_14 = arith.constant dense<0.000000e+00> : vector<16x64xf32>
    %18 = tpu.matmul %16, %17, %cst_14 {dimension_numbers = #tpu.dot_dimension_numbers<[1], [0], [0], [1], [0, 0, 1, 1], [], []>} : vector<16x256xbf16>, vector<256x64xbf16>, vector<16x64xf32> -> vector<16x64xf32>
    %c0_15 = arith.constant 0 : index
    %c0_16 = arith.constant 0 : index
    %19 = vector.load %arg7[%c0_15, %c0_16] : memref<1x64xf32, #tpu.memory_space<vmem>>, vector<1x64xf32>
    %20 = vector.broadcast %19 : vector<1x64xf32> to vector<16x64xf32>
    %21 = arith.addf %18, %20 : vector<16x64xf32>
    %cst_17 = arith.constant 0.000000e+00 : f32
    %22 = vector.broadcast %cst_17 : f32 to vector<16x64xf32>
    %23 = arith.maximumf %21, %22 : vector<16x64xf32>
    %c0_18 = arith.constant 0 : index
    %c0_19 = arith.constant 0 : index
    %24 = vector.load %arg8[%c0_18, %c0_19] : memref<1x64xf32, #tpu.memory_space<vmem>>, vector<1x64xf32>
    %25 = vector.broadcast %24 : vector<1x64xf32> to vector<16x64xf32>
    %26 = arith.mulf %23, %25 : vector<16x64xf32>
    %cst_20 = arith.constant dense<0.000000e+00> : vector<16xf32>
    %27 = vector.multi_reduction <add>, %26, %cst_20 [1] : vector<16x64xf32> to vector<16xf32>
    %28 = vector.shape_cast %27 : vector<16xf32> to vector<16x1xf32>
    %c0_21 = arith.constant 0 : index
    %c0_22 = arith.constant 0 : index
    %29 = vector.load %arg9[%c0_21, %c0_22] : memref<1x1xf32, #tpu.memory_space<vmem>>, vector<1x1xf32>
    %30 = vector.broadcast %29 : vector<1x1xf32> to vector<16x1xf32>
    %31 = arith.addf %28, %30 : vector<16x1xf32>
    %c0_23 = arith.constant 0 : index
    %c0_24 = arith.constant 0 : index
    %32 = vector.load %arg10[%c0_23, %c0_24] : memref<16x1xf32, #tpu.memory_space<vmem>>, vector<16x1xf32>
    tpu.vector_store %arg10[%c0_23, %c0_24], %31 {strides = array<i32>} : memref<16x1xf32, #tpu.memory_space<vmem>>, vector<16x1xf32>,
    return
  }
  func.func @transform_0(%arg0: i32) -> (i32, i32) {
    %c0_i32 = arith.constant 0 : i32
    %c0_i32_0 = arith.constant 0 : i32
    return %arg0, %c0_i32 : i32, i32
  }
  func.func @transform_1(%arg0: i32) -> (i32, i32) {
    %c0_i32 = arith.constant 0 : i32
    %c0_i32_0 = arith.constant 0 : i32
    %c0_i32_1 = arith.constant 0 : i32
    return %c0_i32, %c0_i32_0 : i32, i32
  }
  func.func @transform_2(%arg0: i32) -> (i32, i32) {
    %c0_i32 = arith.constant 0 : i32
    %c0_i32_0 = arith.constant 0 : i32
    %c0_i32_1 = arith.constant 0 : i32
    return %c0_i32, %c0_i32_0 : i32, i32
  }
  func.func @transform_3(%arg0: i32) -> (i32, i32) {
    %c0_i32 = arith.constant 0 : i32
    %c0_i32_0 = arith.constant 0 : i32
    %c0_i32_1 = arith.constant 0 : i32
    return %c0_i32, %c0_i32_0 : i32, i32
  }
  func.func @transform_4(%arg0: i32) -> (i32, i32) {
    %c0_i32 = arith.constant 0 : i32
    %c0_i32_0 = arith.constant 0 : i32
    %c0_i32_1 = arith.constant 0 : i32
    return %c0_i32, %c0_i32_0 : i32, i32
  }
  func.func @transform_5(%arg0: i32) -> (i32, i32) {
    %c0_i32 = arith.constant 0 : i32
    %c0_i32_0 = arith.constant 0 : i32
    %c0_i32_1 = arith.constant 0 : i32
    return %c0_i32, %c0_i32_0 : i32, i32
  }
  func.func @transform_6(%arg0: i32) -> (i32, i32) {
    %c0_i32 = arith.constant 0 : i32
    %c0_i32_0 = arith.constant 0 : i32
    %c0_i32_1 = arith.constant 0 : i32
    return %c0_i32, %c0_i32_0 : i32, i32
  }
  func.func @transform_7(%arg0: i32) -> (i32, i32) {
    %c0_i32 = arith.constant 0 : i32
    %c0_i32_0 = arith.constant 0 : i32
    %c0_i32_1 = arith.constant 0 : i32
    return %c0_i32, %c0_i32_0 : i32, i32
  }
  func.func @transform_8(%arg0: i32) -> (i32, i32) {
    %c0_i32 = arith.constant 0 : i32
    %c0_i32_0 = arith.constant 0 : i32
    %c0_i32_1 = arith.constant 0 : i32
    return %c0_i32, %c0_i32_0 : i32, i32
  }
  func.func @transform_9(%arg0: i32) -> (i32, i32) {
    %c0_i32 = arith.constant 0 : i32
    %c0_i32_0 = arith.constant 0 : i32
    return %arg0, %c0_i32 : i32, i32
  }
}

</mosaic_0001>

<llo_original>
// kernel: regression_model_forward.1
$region0: #{regression_model_forward.1}
  #allocation0 [shape = 'u32[]', space=smem, size = 0x4, offset = 0x4, fixed_abs, tag = 'smem constant byte address 0x4 - core index']
  #allocation1 [shape = 'u32[144,128]{1,0:T(1,128)}', space=vmem, size = 0x12000, scoped, tag = 'internal scratch']
  #allocation2 [shape = 'f32[1,1]{1,0:T(1,128)S(1)}', space=vmem, size = 0x200, scoped, tag = 'scoped memory for regression_model_forward.1']
  %s0 = inlined_call_operand.vmem [shape: bf16[16,32], index: 0, kind: input, shape index: {}]
  %s1 = inlined_call_operand.vmem [shape: bf16[32,1024], index: 1, kind: input, shape index: {}]
  %s2 = inlined_call_operand.vmem [shape: f32[1,1024], index: 2, kind: input, shape index: {}]
  %s3 = inlined_call_operand.hbm [shape: bf16[1024,256], index: 3, kind: input, shape index: {}]
  %s4 = inlined_call_operand.vmem [shape: f32[1,256], index: 4, kind: input, shape index: {}]
  %s5 = inlined_call_operand.vmem [shape: bf16[256,64], index: 5, kind: input, shape index: {}]
  %s6 = inlined_call_operand.vmem [shape: f32[1,64], index: 6, kind: input, shape index: {}]
  %s7 = inlined_call_operand.vmem [shape: f32[1,64], index: 7, kind: input, shape index: {}]
  %s8 = inlined_call_operand.<no memory space> [shape: f32[1,1], index: 8, kind: input, shape index: {}]
  %s9 = inlined_call_operand.vmem [shape: f32[16,1], index: 9, kind: output, shape index: {}]
  %s10 = sld [smem:[#allocation0]]
  $region50: #{regression_model_forward.1} parent=0
    _
  %s12 = ssub.s32 1, %s10
  %s13 = scalar_select 0, %s12, %s10
  %v14 = vstv %s8
  %15 = vst [vmem:[#allocation2] sm:$0x1] %v14
  $region1: #{regression_model_forward.1} parent=0
    #allocation3 [shape = 'u8[524288]{0}', space=vmem, size = 0x80000, scoped, tag = 'input window, operand 3, single buffered']
    #allocation4 [shape = 's32[1]{0}', space=sflag, size = 0x4, scoped, tag = 'scoped memory for regression_model_forward.1']
    %16 = vsyncpa [#allocation4], 0
    // Predicated region
    $region2: #{regression_model_forward.1} parent=1 // pred_check
      _
    $region3: #{regression_model_forward.1} parent=1 // pred_check_branch
      %18 = sbr.rel (0) target = $region5
    $region4: #{regression_model_forward.1} parent=1 // pred_region
      _
    $region5: #{regression_model_forward.1} parent=1 // pred_fallthru
      _
    // Predicated region
    $region6: #{regression_model_forward.1} parent=1 // pred_check
      _
    $region7: #{regression_model_forward.1} parent=1 // pred_check_branch
      %20 = sbr.rel (0) target = $region9
    $region8: #{regression_model_forward.1} parent=1 // pred_region
      _
    $region9: #{regression_model_forward.1} parent=1 // pred_fallthru
      _
    // Predicated region
    $region10: #{regression_model_forward.1} parent=1 // pred_check
      _
    $region11: #{regression_model_forward.1} parent=1 // pred_check_branch
      %22 = sbr.rel (0) target = $region13
    $region12: #{regression_model_forward.1} parent=1 // pred_region
      _
    $region13: #{regression_model_forward.1} parent=1 // pred_fallthru
      _
    // Predicated region
    $region14: #{regression_model_forward.1} parent=1 // pred_check
      _
    $region15: #{regression_model_forward.1} parent=1 // pred_check_branch
      %24 = sbr.rel (0) target = $region17
    $region16: #{regression_model_forward.1} parent=1 // pred_region
      %s26 = ssub.s32 16384, 16384
      %27 = vsyncadd [#allocation4], %s26
      %s28 = sshll.u32 [#allocation3], 4
      %s29 = int_to_ptr.vmem [resolvable:$true] %s28
      %34 = dma.hbm_to_vmem [thread:$0]  %s3, 16384, %s29, [#allocation4], 128, 128, 8
    $region17: #{regression_model_forward.1} parent=1 // pred_fallthru
      _
    // Predicated region
    $region18: #{regression_model_forward.1} parent=1 // pred_check
      _
    $region19: #{regression_model_forward.1} parent=1 // pred_check_branch
      %36 = sbr.rel (0) target = $region21
    $region20: #{regression_model_forward.1} parent=1 // pred_region
      _
    $region21: #{regression_model_forward.1} parent=1 // pred_fallthru
      _
    // Predicated region
    $region22: #{regression_model_forward.1} parent=1 // pred_check
      _
    $region23: #{regression_model_forward.1} parent=1 // pred_check_branch
      %38 = sbr.rel (0) target = $region25
    $region24: #{regression_model_forward.1} parent=1 // pred_region
      _
    $region25: #{regression_model_forward.1} parent=1 // pred_fallthru
      _
    // Predicated region
    $region26: #{regression_model_forward.1} parent=1 // pred_check
      _
    $region27: #{regression_model_forward.1} parent=1 // pred_check_branch
      %40 = sbr.rel (0) target = $region29
    $region28: #{regression_model_forward.1} parent=1 // pred_region
      _
    $region29: #{regression_model_forward.1} parent=1 // pred_fallthru
      _
    // Predicated region
    $region30: #{regression_model_forward.1} parent=1 // pred_check
      _
    $region31: #{regression_model_forward.1} parent=1 // pred_check_branch
      %42 = sbr.rel (0) target = $region33
    $region32: #{regression_model_forward.1} parent=1 // pred_region
      _
    $region33: #{regression_model_forward.1} parent=1 // pred_fallthru
      _
    // Predicated region
    $region34: #{regression_model_forward.1} parent=1 // pred_check
      _
    $region35: #{regression_model_forward.1} parent=1 // pred_check_branch
      %44 = sbr.rel (0) target = $region37
    $region36: #{regression_model_forward.1} parent=1 // pred_region
      _
    $region37: #{regression_model_forward.1} parent=1 // pred_fallthru
      _
    // Predicated region
    $region38: #{regression_model_forward.1} parent=1 // pred_check
      _
    $region39: #{regression_model_forward.1} parent=1 // pred_check_branch
      %46 = sbr.rel (0) target = $region41
    $region40: #{regression_model_forward.1} parent=1 // pred_region
      %47 = dma.done [#allocation4], 16384
    $region41: #{regression_model_forward.1} parent=1 // pred_fallthru
      _
    %v49 = vld [vmem:[%s0] sm:$0xf]
    %v50 = vld [vmem:[%s0 + $0x4] sm:$0xf]
    %v51 = vld [vmem:[%s1] sm:$0xff]
    %v52 = vld [vmem:[%s1 + $0x8] sm:$0xff]
    %v53 = vld [vmem:[%s1 + $0x10] sm:$0xff]
    %v54 = vld [vmem:[%s1 + $0x18] sm:$0xff]
    %v55 = vld [vmem:[%s1 + $0x20] sm:$0xff]
    %v56 = vld [vmem:[%s1 + $0x28] sm:$0xff]
    %v57 = vld [vmem:[%s1 + $0x30] sm:$0xff]
    %v58 = vld [vmem:[%s1 + $0x38] sm:$0xff]
    %v59 = vld [vmem:[%s1 + $0x40] sm:$0xff]
    %v60 = vld [vmem:[%s1 + $0x48] sm:$0xff]
    %v61 = vld [vmem:[%s1 + $0x50] sm:$0xff]
    %v62 = vld [vmem:[%s1 + $0x58] sm:$0xff]
    %v63 = vld [vmem:[%s1 + $0x60] sm:$0xff]
    %v64 = vld [vmem:[%s1 + $0x68] sm:$0xff]
    %v65 = vld [vmem:[%s1 + $0x70] sm:$0xff]
    %v66 = vld [vmem:[%s1 + $0x78] sm:$0xff]
    %v67 = vld [vmem:[%s2] sm:$0xff]
    %v69 = vlaneseq
    %v70 = vshrl.u32 %v69, 7
    %v71 = vsub.s32 0, %v70
    %v72 = vrot.slane %v67, %v71
    %v73 = vlaneseq
    %v74 = vshrl.u32 %v73, 7
    %v75 = vsub.s32 1, %v74
    %v76 = vrot.slane %v67, %v75
    %v77 = vlaneseq
    %v78 = vshrl.u32 %v77, 7
    %v79 = vsub.s32 2, %v78
    %v80 = vrot.slane %v67, %v79
    %v81 = vlaneseq
    %v82 = vshrl.u32 %v81, 7
    %v83 = vsub.s32 3, %v82
    %v84 = vrot.slane %v67, %v83
    %v85 = vlaneseq
    %v86 = vshrl.u32 %v85, 7
    %v87 = vsub.s32 4, %v86
    %v88 = vrot.slane %v67, %v87
    %v89 = vlaneseq
    %v90 = vshrl.u32 %v89, 7
    %v91 = vsub.s32 5, %v90
    %v92 = vrot.slane %v67, %v91
    %v93 = vlaneseq
    %v94 = vshrl.u32 %v93, 7
    %v95 = vsub.s32 6, %v94
    %v96 = vrot.slane %v67, %v95
    %v97 = vlaneseq
    %v98 = vshrl.u32 %v97, 7
    %v99 = vsub.s32 7, %v98
    %v100 = vrot.slane %v67, %v99
    %v111 = vunpack.c.l.b16 %v49
    %v112 = vunpack.c.l.b16 %v50
    %v113 = vpack.c.b16 %v112, %v111
    %v130 = vunpack.c.l.b16 %v51
    %v131 = vunpack.c.h.b16 %v51
    %v132 = vunpack.c.l.b16 %v52
    %v133 = vunpack.c.h.b16 %v52
    %v134 = vunpack.c.l.b16 %v53
    %v135 = vunpack.c.h.b16 %v53
    %v136 = vunpack.c.l.b16 %v54
    %v137 = vunpack.c.h.b16 %v54
    %v138 = vunpack.c.l.b16 %v55
    %v139 = vunpack.c.h.b16 %v55
    %v140 = vunpack.c.l.b16 %v56
    %v141 = vunpack.c.h.b16 %v56
    %v142 = vunpack.c.l.b16 %v57
    %v143 = vunpack.c.h.b16 %v57
    %v144 = vunpack.c.l.b16 %v58
    %v145 = vunpack.c.h.b16 %v58
    %v146 = vunpack.c.l.b16 %v59
    %v147 = vunpack.c.h.b16 %v59
    %v148 = vunpack.c.l.b16 %v60
    %v149 = vunpack.c.h.b16 %v60
    %v150 = vunpack.c.l.b16 %v61
    %v151 = vunpack.c.h.b16 %v61
    %v152 = vunpack.c.l.b16 %v62
    %v153 = vunpack.c.h.b16 %v62
    %v154 = vunpack.c.l.b16 %v63
    %v155 = vunpack.c.h.b16 %v63
    %v156 = vunpack.c.l.b16 %v64
    %v157 = vunpack.c.h.b16 %v64
    %v158 = vunpack.c.l.b16 %v65
    %v159 = vunpack.c.h.b16 %v65
    %v160 = vunpack.c.l.b16 %v66
    %v161 = vunpack.c.h.b16 %v66
    %v162 = vpack.c.b16 %v138, %v130
    %v163 = vpack.c.b16 %v139, %v131
    %v164 = vpack.c.b16 %v140, %v132
    %v165 = vpack.c.b16 %v141, %v133
    %v166 = vpack.c.b16 %v142, %v134
    %v167 = vpack.c.b16 %v143, %v135
    %v168 = vpack.c.b16 %v144, %v136
    %v169 = vpack.c.b16 %v145, %v137
    %v170 = vpack.c.b16 %v154, %v146
    %v171 = vpack.c.b16 %v155, %v147
    %v172 = vpack.c.b16 %v156, %v148
    %v173 = vpack.c.b16 %v157, %v149
    %v174 = vpack.c.b16 %v158, %v150
    %v175 = vpack.c.b16 %v159, %v151
    %v176 = vpack.c.b16 %v160, %v152
    %v177 = vpack.c.b16 %v161, %v153
    %vm194 = vcmask 261120
    %v196 = vsel %vm194, %v113, 0
    %198 = vmatprep.subr.bf16.mxu0 0
    %199 = vmatpush1.bf16.msra.mxu0 0
    %200 = vmatprep.subr.bf16.mxu0 0
    %201 = vmatpush1.bf16.msra.mxu0 0
    %202 = vmatprep.subr.bf16.mxu0 0
    %203 = vmatpush1.bf16.msra.mxu0 0
    %204 = vmatprep.subr.bf16.mxu0 0
    %205 = vmatpush1.bf16.msra.mxu0 0
    %206 = vmatprep.subr.bf16.mxu0 0
    %207 = vmatpush1.bf16.msra.mxu0 0
    %208 = vmatprep.subr.bf16.mxu0 0
    %209 = vmatpush1.bf16.msra.mxu0 0
    %210 = vmatprep.subr.bf16.mxu0 %v171
    %211 = vmatpush1.bf16.msra.mxu0 %v170
    %212 = vmatprep.subr.bf16.mxu0 %v163
    %213 = vmatpush1.bf16.msra.mxu0 %v162
    %214 = vmatprep.subr.bf16.mxu0 0
    %215 = vmatpush2.bf16.msra.mxu0 0
    %216 = vmatprep.subr.bf16.mxu0 0
    %217 = vmatpush2.bf16.msra.mxu0 0
    %218 = vmatprep.subr.bf16.mxu0 0
    %219 = vmatpush2.bf16.msra.mxu0 0
    %220 = vmatprep.subr.bf16.mxu0 0
    %221 = vmatpush2.bf16.msra.mxu0 0
    %222 = vmatprep.subr.bf16.mxu0 0
    %223 = vmatpush2.bf16.msra.mxu0 0
    %224 = vmatprep.subr.bf16.mxu0 0
    %225 = vmatpush2.bf16.msra.mxu0 0
    %226 = vmatprep.subr.bf16.mxu0 0
    %227 = vmatpush2.bf16.msra.mxu0 0
    %228 = vmatprep.subr.bf16.mxu0 0
    %229 = vmatpush2.bf16.msra.mxu0 0
    %230 = vmatprep.mubr.bf16.mxu0 0
    %231 = vmatmul.mubr.bf16.gmra.mxu0 %v196
    %v232 = vpop.f32.mrf.mxu0
    %v233 = vadd.f32 %v72, %v232
    %v234 = vpop.f32.mrf.mxu0
    %v235 = vadd.f32 %v76, %v234
    %v236 = vpop.f32.mrf.mxu0
    %v237 = vadd.f32 %v72, %v236
    %v238 = vpop.f32.mrf.mxu0
    %v239 = vadd.f32 %v76, %v238
    %240 = vdwg.mxu0
    %241 = vmatprep.subr.bf16.mxu0 0
    %242 = vmatpush1.bf16.msra.mxu0 0
    %243 = vmatprep.subr.bf16.mxu0 0
    %244 = vmatpush1.bf16.msra.mxu0 0
    %245 = vmatprep.subr.bf16.mxu0 0
    %246 = vmatpush1.bf16.msra.mxu0 0
    %247 = vmatprep.subr.bf16.mxu0 0
    %248 = vmatpush1.bf16.msra.mxu0 0
    %249 = vmatprep.subr.bf16.mxu0 0
    %250 = vmatpush1.bf16.msra.mxu0 0
    %251 = vmatprep.subr.bf16.mxu0 0
    %252 = vmatpush1.bf16.msra.mxu0 0
    %253 = vmatprep.subr.bf16.mxu0 %v173
    %254 = vmatpush1.bf16.msra.mxu0 %v172
    %255 = vmatprep.subr.bf16.mxu0 %v165
    %256 = vmatpush1.bf16.msra.mxu0 %v164
    %257 = vmatprep.subr.bf16.mxu0 0
    %258 = vmatpush2.bf16.msra.mxu0 0
    %259 = vmatprep.subr.bf16.mxu0 0
    %260 = vmatpush2.bf16.msra.mxu0 0
    %261 = vmatprep.subr.bf16.mxu0 0
    %262 = vmatpush2.bf16.msra.mxu0 0
    %263 = vmatprep.subr.bf16.mxu0 0
    %264 = vmatpush2.bf16.msra.mxu0 0
    %265 = vmatprep.subr.bf16.mxu0 0
    %266 = vmatpush2.bf16.msra.mxu0 0
    %267 = vmatprep.subr.bf16.mxu0 0
    %268 = vmatpush2.bf16.msra.mxu0 0
    %269 = vmatprep.subr.bf16.mxu0 0
    %270 = vmatpush2.bf16.msra.mxu0 0
    %271 = vmatprep.subr.bf16.mxu0 0
    %272 = vmatpush2.bf16.msra.mxu0 0
    %273 = vmatprep.mubr.bf16.mxu0 0
    %274 = vmatmul.mubr.bf16.gmra.mxu0 %v196
    %v275 = vpop.f32.mrf.mxu0
    %v276 = vadd.f32 %v80, %v275
    %v277 = vpop.f32.mrf.mxu0
    %v278 = vadd.f32 %v84, %v277
    %v279 = vpop.f32.mrf.mxu0
    %v280 = vadd.f32 %v80, %v279
    %v281 = vpop.f32.mrf.mxu0
    %v282 = vadd.f32 %v84, %v281
    %283 = vdwg.mxu0
    %284 = vmatprep.subr.bf16.mxu0 0
    %285 = vmatpush1.bf16.msra.mxu0 0
    %286 = vmatprep.subr.bf16.mxu0 0
    %287 = vmatpush1.bf16.msra.mxu0 0
    %288 = vmatprep.subr.bf16.mxu0 0
    %289 = vmatpush1.bf16.msra.mxu0 0
    %290 = vmatprep.subr.bf16.mxu0 0
    %291 = vmatpush1.bf16.msra.mxu0 0
    %292 = vmatprep.subr.bf16.mxu0 0
    %293 = vmatpush1.bf16.msra.mxu0 0
    %294 = vmatprep.subr.bf16.mxu0 0
    %295 = vmatpush1.bf16.msra.mxu0 0
    %296 = vmatprep.subr.bf16.mxu0 %v175
    %297 = vmatpush1.bf16.msra.mxu0 %v174
    %298 = vmatprep.subr.bf16.mxu0 %v167
    %299 = vmatpush1.bf16.msra.mxu0 %v166
    %300 = vmatprep.subr.bf16.mxu0 0
    %301 = vmatpush2.bf16.msra.mxu0 0
    %302 = vmatprep.subr.bf16.mxu0 0
    %303 = vmatpush2.bf16.msra.mxu0 0
    %304 = vmatprep.subr.bf16.mxu0 0
    %305 = vmatpush2.bf16.msra.mxu0 0
    %306 = vmatprep.subr.bf16.mxu0 0
    %307 = vmatpush2.bf16.msra.mxu0 0
    %308 = vmatprep.subr.bf16.mxu0 0
    %309 = vmatpush2.bf16.msra.mxu0 0
    %310 = vmatprep.subr.bf16.mxu0 0
    %311 = vmatpush2.bf16.msra.mxu0 0
    %312 = vmatprep.subr.bf16.mxu0 0
    %313 = vmatpush2.bf16.msra.mxu0 0
    %314 = vmatprep.subr.bf16.mxu0 0
    %315 = vmatpush2.bf16.msra.mxu0 0
    %316 = vmatprep.mubr.bf16.mxu0 0
    %317 = vmatmul.mubr.bf16.gmra.mxu0 %v196
    %v318 = vpop.f32.mrf.mxu0
    %v319 = vadd.f32 %v88, %v318
    %v320 = vpop.f32.mrf.mxu0
    %v321 = vadd.f32 %v92, %v320
    %v322 = vpop.f32.mrf.mxu0
    %v323 = vadd.f32 %v88, %v322
    %v324 = vpop.f32.mrf.mxu0
    %v325 = vadd.f32 %v92, %v324
    %326 = vdwg.mxu0
    %327 = vmatprep.subr.bf16.mxu0 0
    %328 = vmatpush1.bf16.msra.mxu0 0
    %329 = vmatprep.subr.bf16.mxu0 0
    %330 = vmatpush1.bf16.msra.mxu0 0
    %331 = vmatprep.subr.bf16.mxu0 0
    %332 = vmatpush1.bf16.msra.mxu0 0
    %333 = vmatprep.subr.bf16.mxu0 0
    %334 = vmatpush1.bf16.msra.mxu0 0
    %335 = vmatprep.subr.bf16.mxu0 0
    %336 = vmatpush1.bf16.msra.mxu0 0
    %337 = vmatprep.subr.bf16.mxu0 0
    %338 = vmatpush1.bf16.msra.mxu0 0
    %339 = vmatprep.subr.bf16.mxu0 %v177
    %340 = vmatpush1.bf16.msra.mxu0 %v176
    %341 = vmatprep.subr.bf16.mxu0 %v169
    %342 = vmatpush1.bf16.msra.mxu0 %v168
    %343 = vmatprep.subr.bf16.mxu0 0
    %344 = vmatpush2.bf16.msra.mxu0 0
    %345 = vmatprep.subr.bf16.mxu0 0
    %346 = vmatpush2.bf16.msra.mxu0 0
    %347 = vmatprep.subr.bf16.mxu0 0
    %348 = vmatpush2.bf16.msra.mxu0 0
    %349 = vmatprep.subr.bf16.mxu0 0
    %350 = vmatpush2.bf16.msra.mxu0 0
    %351 = vmatprep.subr.bf16.mxu0 0
    %352 = vmatpush2.bf16.msra.mxu0 0
    %353 = vmatprep.subr.bf16.mxu0 0
    %354 = vmatpush2.bf16.msra.mxu0 0
    %355 = vmatprep.subr.bf16.mxu0 0
    %356 = vmatpush2.bf16.msra.mxu0 0
    %357 = vmatprep.subr.bf16.mxu0 0
    %358 = vmatpush2.bf16.msra.mxu0 0
    %359 = vmatprep.mubr.bf16.mxu0 0
    %360 = vmatmul.mubr.bf16.gmra.mxu0 %v196
    %v361 = vpop.f32.mrf.mxu0
    %v362 = vadd.f32 %v96, %v361
    %v363 = vpop.f32.mrf.mxu0
    %v364 = vadd.f32 %v100, %v363
    %v365 = vpop.f32.mrf.mxu0
    %v366 = vadd.f32 %v96, %v365
    %v367 = vpop.f32.mrf.mxu0
    %v368 = vadd.f32 %v100, %v367
    %369 = vdwg.mxu0
    %v370 = vmax.f32 %v233, 0.0
    %v371 = vmax.f32 %v235, 0.0
    %v372 = vmax.f32 %v276, 0.0
    %v373 = vmax.f32 %v278, 0.0
    %v374 = vmax.f32 %v319, 0.0
    %v375 = vmax.f32 %v321, 0.0
    %v376 = vmax.f32 %v362, 0.0
    %v377 = vmax.f32 %v364, 0.0
    %v378 = vmax.f32 %v237, 0.0
    %v379 = vmax.f32 %v239, 0.0
    %v380 = vmax.f32 %v280, 0.0
    %v381 = vmax.f32 %v282, 0.0
    %v382 = vmax.f32 %v323, 0.0
    %v383 = vmax.f32 %v325, 0.0
    %v384 = vmax.f32 %v366, 0.0
    %v385 = vmax.f32 %v368, 0.0
    %v386 = vpack.c.bf16 %v378, %v370
    %v387 = vpack.c.bf16 %v379, %v371
    %v388 = vpack.c.bf16 %v380, %v372
    %v389 = vpack.c.bf16 %v381, %v373
    %v390 = vpack.c.bf16 %v382, %v374
    %v391 = vpack.c.bf16 %v383, %v375
    %v392 = vpack.c.bf16 %v384, %v376
    %v393 = vpack.c.bf16 %v385, %v377
    %v394 = vld [vmem:[#allocation3] sm:$0xff]
    %v395 = vld [vmem:[#allocation3 + $0x8] sm:$0xff]
    %v396 = vld [vmem:[#allocation3 + $0x10] sm:$0xff]
    %v397 = vld [vmem:[#allocation3 + $0x18] sm:$0xff]
    %v398 = vld [vmem:[#allocation3 + $0x20] sm:$0xff]
    %v399 = vld [vmem:[#allocation3 + $0x28] sm:$0xff]
    %v400 = vld [vmem:[#allocation3 + $0x30] sm:$0xff]
    %v401 = vld [vmem:[#allocation3 + $0x38] sm:$0xff]
    %v402 = vld [vmem:[#allocation3 + $0x40] sm:$0xff]
    %v403 = vld [vmem:[#allocation3 + $0x48] sm:$0xff]
    %v404 = vld [vmem:[#allocation3 + $0x50] sm:$0xff]
    %v405 = vld [vmem:[#allocation3 + $0x58] sm:$0xff]
    %v406 = vld [vmem:[#allocation3 + $0x60] sm:$0xff]
    %v407 = vld [vmem:[#allocation3 + $0x68] sm:$0xff]
    %v408 = vld [vmem:[#allocation3 + $0x70] sm:$0xff]
    %v409 = vld [vmem:[#allocation3 + $0x78] sm:$0xff]
    %v410 = vld [vmem:[#allocation3 + $0x80] sm:$0xff]
    %v411 = vld [vmem:[#allocation3 + $0x88] sm:$0xff]
    %v412 = vld [vmem:[#allocation3 + $0x90] sm:$0xff]
    %v413 = vld [vmem:[#allocation3 + $0x98] sm:$0xff]
    %v414 = vld [vmem:[#allocation3 + $0xa0] sm:$0xff]
    %v415 = vld [vmem:[#allocation3 + $0xa8] sm:$0xff]
    %v416 = vld [vmem:[#allocation3 + $0xb0] sm:$0xff]
    %v417 = vld [vmem:[#allocation3 + $0xb8] sm:$0xff]
    %v418 = vld [vmem:[#allocation3 + $0xc0] sm:$0xff]
    %v419 = vld [vmem:[#allocation3 + $0xc8] sm:$0xff]
    %v420 = vld [vmem:[#allocation3 + $0xd0] sm:$0xff]
    %v421 = vld [vmem:[#allocation3 + $0xd8] sm:$0xff]
    %v422 = vld [vmem:[#allocation3 + $0xe0] sm:$0xff]
    %v423 = vld [vmem:[#allocation3 + $0xe8] sm:$0xff]
    %v424 = vld [vmem:[#allocation3 + $0xf0] sm:$0xff]
    %v425 = vld [vmem:[#allocation3 + $0xf8] sm:$0xff]
    %v426 = vld [vmem:[#allocation3 + $0x100] sm:$0xff]
    %v427 = vld [vmem:[#allocation3 + $0x108] sm:$0xff]
    %v428 = vld [vmem:[#allocation3 + $0x110] sm:$0xff]
    %v429 = vld [vmem:[#allocation3 + $0x118] sm:$0xff]
    %v430 = vld [vmem:[#allocation3 + $0x120] sm:$0xff]
    %v431 = vld [vmem:[#allocation3 + $0x128] sm:$0xff]
    %v432 = vld [vmem:[#allocation3 + $0x130] sm:$0xff]
    %v433 = vld [vmem:[#allocation3 + $0x138] sm:$0xff]
    %v434 = vld [vmem:[#allocation3 + $0x140] sm:$0xff]
    %v435 = vld [vmem:[#allocation3 + $0x148] sm:$0xff]
    %v436 = vld [vmem:[#allocation3 + $0x150] sm:$0xff]
    %v437 = vld [vmem:[#allocation3 + $0x158] sm:$0xff]
    %v438 = vld [vmem:[#allocation3 + $0x160] sm:$0xff]
    %v439 = vld [vmem:[#allocation3 + $0x168] sm:$0xff]
    %v440 = vld [vmem:[#allocation3 + $0x170] sm:$0xff]
    %v441 = vld [vmem:[#allocation3 + $0x178] sm:$0xff]
    %v442 = vld [vmem:[#allocation3 + $0x180] sm:$0xff]
    %v443 = vld [vmem:[#allocation3 + $0x188] sm:$0xff]
    %v444 = vld [vmem:[#allocation3 + $0x190] sm:$0xff]
    %v445 = vld [vmem:[#allocation3 + $0x198] sm:$0xff]
    %v446 = vld [vmem:[#allocation3 + $0x1a0] sm:$0xff]
    %v447 = vld [vmem:[#allocation3 + $0x1a8] sm:$0xff]
    %v448 = vld [vmem:[#allocation3 + $0x1b0] sm:$0xff]
    %v449 = vld [vmem:[#allocation3 + $0x1b8] sm:$0xff]
    %v450 = vld [vmem:[#allocation3 + $0x1c0] sm:$0xff]
    %v451 = vld [vmem:[#allocation3 + $0x1c8] sm:$0xff]
    %v452 = vld [vmem:[#allocation3 + $0x1d0] sm:$0xff]
    %v453 = vld [vmem:[#allocation3 + $0x1d8] sm:$0xff]
    %v454 = vld [vmem:[#allocation3 + $0x1e0] sm:$0xff]
    %v455 = vld [vmem:[#allocation3 + $0x1e8] sm:$0xff]
    %v456 = vld [vmem:[#allocation3 + $0x1f0] sm:$0xff]
    %v457 = vld [vmem:[#allocation3 + $0x1f8] sm:$0xff]
    %v458 = vld [vmem:[#allocation3 + $0x200] sm:$0xff]
    %v459 = vld [vmem:[#allocation3 + $0x208] sm:$0xff]
    %v460 = vld [vmem:[#allocation3 + $0x210] sm:$0xff]
    %v461 = vld [vmem:[#allocation3 + $0x218] sm:$0xff]
    %v462 = vld [vmem:[#allocation3 + $0x220] sm:$0xff]
    %v463 = vld [vmem:[#allocation3 + $0x228] sm:$0xff]
    %v464 = vld [vmem:[#allocation3 + $0x230] sm:$0xff]
    %v465 = vld [vmem:[#allocation3 + $0x238] sm:$0xff]
    %v466 = vld [vmem:[#allocation3 + $0x240] sm:$0xff]
    %v467 = vld [vmem:[#allocation3 + $0x248] sm:$0xff]
    %v468 = vld [vmem:[#allocation3 + $0x250] sm:$0xff]
    %v469 = vld [vmem:[#allocation3 + $0x258] sm:$0xff]
    %v470 = vld [vmem:[#allocation3 + $0x260] sm:$0xff]
    %v471 = vld [vmem:[#allocation3 + $0x268] sm:$0xff]
    %v472 = vld [vmem:[#allocation3 + $0x270] sm:$0xff]
    %v473 = vld [vmem:[#allocation3 + $0x278] sm:$0xff]
    %v474 = vld [vmem:[#allocation3 + $0x280] sm:$0xff]
    %v475 = vld [vmem:[#allocation3 + $0x288] sm:$0xff]
    %v476 = vld [vmem:[#allocation3 + $0x290] sm:$0xff]
    %v477 = vld [vmem:[#allocation3 + $0x298] sm:$0xff]
    %v478 = vld [vmem:[#allocation3 + $0x2a0] sm:$0xff]
    %v479 = vld [vmem:[#allocation3 + $0x2a8] sm:$0xff]
    %v480 = vld [vmem:[#allocation3 + $0x2b0] sm:$0xff]
    %v481 = vld [vmem:[#allocation3 + $0x2b8] sm:$0xff]
    %v482 = vld [vmem:[#allocation3 + $0x2c0] sm:$0xff]
    %v483 = vld [vmem:[#allocation3 + $0x2c8] sm:$0xff]
    %v484 = vld [vmem:[#allocation3 + $0x2d0] sm:$0xff]
    %v485 = vld [vmem:[#allocation3 + $0x2d8] sm:$0xff]
    %v486 = vld [vmem:[#allocation3 + $0x2e0] sm:$0xff]
    %v487 = vld [vmem:[#allocation3 + $0x2e8] sm:$0xff]
    %v488 = vld [vmem:[#allocation3 + $0x2f0] sm:$0xff]
    %v489 = vld [vmem:[#allocation3 + $0x2f8] sm:$0xff]
    %v490 = vld [vmem:[#allocation3 + $0x300] sm:$0xff]
    %v491 = vld [vmem:[#allocation3 + $0x308] sm:$0xff]
    %v492 = vld [vmem:[#allocation3 + $0x310] sm:$0xff]
    %v493 = vld [vmem:[#allocation3 + $0x318] sm:$0xff]
    %v494 = vld [vmem:[#allocation3 + $0x320] sm:$0xff]
    %v495 = vld [vmem:[#allocation3 + $0x328] sm:$0xff]
    %v496 = vld [vmem:[#allocation3 + $0x330] sm:$0xff]
    %v497 = vld [vmem:[#allocation3 + $0x338] sm:$0xff]
    %v498 = vld [vmem:[#allocation3 + $0x340] sm:$0xff]
    %v499 = vld [vmem:[#allocation3 + $0x348] sm:$0xff]
    %v500 = vld [vmem:[#allocation3 + $0x350] sm:$0xff]
    %v501 = vld [vmem:[#allocation3 + $0x358] sm:$0xff]
    %v502 = vld [vmem:[#allocation3 + $0x360] sm:$0xff]
    %v503 = vld [vmem:[#allocation3 + $0x368] sm:$0xff]
    %v504 = vld [vmem:[#allocation3 + $0x370] sm:$0xff]
    %v505 = vld [vmem:[#allocation3 + $0x378] sm:$0xff]
    %v506 = vld [vmem:[#allocation3 + $0x380] sm:$0xff]
    %v507 = vld [vmem:[#allocation3 + $0x388] sm:$0xff]
    %v508 = vld [vmem:[#allocation3 + $0x390] sm:$0xff]
    %v509 = vld [vmem:[#allocation3 + $0x398] sm:$0xff]
    %v510 = vld [vmem:[#allocation3 + $0x3a0] sm:$0xff]
    %v511 = vld [vmem:[#allocation3 + $0x3a8] sm:$0xff]
    %v512 = vld [vmem:[#allocation3 + $0x3b0] sm:$0xff]
    %v513 = vld [vmem:[#allocation3 + $0x3b8] sm:$0xff]
    %v514 = vld [vmem:[#allocation3 + $0x3c0] sm:$0xff]
    %v515 = vld [vmem:[#allocation3 + $0x3c8] sm:$0xff]
    %v516 = vld [vmem:[#allocation3 + $0x3d0] sm:$0xff]
    %v517 = vld [vmem:[#allocation3 + $0x3d8] sm:$0xff]
    %v518 = vld [vmem:[#allocation3 + $0x3e0] sm:$0xff]
    %v519 = vld [vmem:[#allocation3 + $0x3e8] sm:$0xff]
    %v520 = vld [vmem:[#allocation3 + $0x3f0] sm:$0xff]
    %v521 = vld [vmem:[#allocation3 + $0x3f8] sm:$0xff]
    %v522 = vld [vmem:[%s4] sm:$0x3]
    %v524 = vlaneseq
    %v525 = vshrl.u32 %v524, 7
    %v526 = vsub.s32 0, %v525
    %v527 = vrot.slane %v522, %v526
    %v528 = vlaneseq
    %v529 = vshrl.u32 %v528, 7
    %v530 = vsub.s32 1, %v529
    %v531 = vrot.slane %v522, %v530
    %v662 = vunpack.c.l.b16 %v394
    %v663 = vunpack.c.h.b16 %v394
    %v664 = vunpack.c.l.b16 %v395
    %v665 = vunpack.c.h.b16 %v395
    %v666 = vunpack.c.l.b16 %v396
    %v667 = vunpack.c.h.b16 %v396
    %v668 = vunpack.c.l.b16 %v397
    %v669 = vunpack.c.h.b16 %v397
    %v670 = vunpack.c.l.b16 %v398
    %v671 = vunpack.c.h.b16 %v398
    %v672 = vunpack.c.l.b16 %v399
    %v673 = vunpack.c.h.b16 %v399
    %v674 = vunpack.c.l.b16 %v400
    %v675 = vunpack.c.h.b16 %v400
    %v676 = vunpack.c.l.b16 %v401
    %v677 = vunpack.c.h.b16 %v401
    %v678 = vunpack.c.l.b16 %v402
    %v679 = vunpack.c.h.b16 %v402
    %v680 = vunpack.c.l.b16 %v403
    %v681 = vunpack.c.h.b16 %v403
    %v682 = vunpack.c.l.b16 %v404
    %v683 = vunpack.c.h.b16 %v404
    %v684 = vunpack.c.l.b16 %v405
    %v685 = vunpack.c.h.b16 %v405
    %v686 = vunpack.c.l.b16 %v406
    %v687 = vunpack.c.h.b16 %v406
    %v688 = vunpack.c.l.b16 %v407
    %v689 = vunpack.c.h.b16 %v407
    %v690 = vunpack.c.l.b16 %v408
    %v691 = vunpack.c.h.b16 %v408
    %v692 = vunpack.c.l.b16 %v409
    %v693 = vunpack.c.h.b16 %v409
    %v694 = vunpack.c.l.b16 %v410
    %v695 = vunpack.c.h.b16 %v410
    %v696 = vunpack.c.l.b16 %v411
    %v697 = vunpack.c.h.b16 %v411
    %v698 = vunpack.c.l.b16 %v412
    %v699 = vunpack.c.h.b16 %v412
    %v700 = vunpack.c.l.b16 %v413
    %v701 = vunpack.c.h.b16 %v413
    %v702 = vunpack.c.l.b16 %v414
    %v703 = vunpack.c.h.b16 %v414
    %v704 = vunpack.c.l.b16 %v415
    %v705 = vunpack.c.h.b16 %v415
    %v706 = vunpack.c.l.b16 %v416
    %v707 = vunpack.c.h.b16 %v416
    %v708 = vunpack.c.l.b16 %v417
    %v709 = vunpack.c.h.b16 %v417
    %v710 = vunpack.c.l.b16 %v418
    %v711 = vunpack.c.h.b16 %v418
    %v712 = vunpack.c.l.b16 %v419
    %v713 = vunpack.c.h.b16 %v419
    %v714 = vunpack.c.l.b16 %v420
    %v715 = vunpack.c.h.b16 %v420
    %v716 = vunpack.c.l.b16 %v421
    %v717 = vunpack.c.h.b16 %v421
    %v718 = vunpack.c.l.b16 %v422
    %v719 = vunpack.c.h.b16 %v422
    %v720 = vunpack.c.l.b16 %v423
    %v721 = vunpack.c.h.b16 %v423
    %v722 = vunpack.c.l.b16 %v424
    %v723 = vunpack.c.h.b16 %v424
    %v724 = vunpack.c.l.b16 %v425
    %v725 = vunpack.c.h.b16 %v425
    %v726 = vunpack.c.l.b16 %v426
    %v727 = vunpack.c.h.b16 %v426
    %v728 = vunpack.c.l.b16 %v427
    %v729 = vunpack.c.h.b16 %v427
    %v730 = vunpack.c.l.b16 %v428
    %v731 = vunpack.c.h.b16 %v428
    %v732 = vunpack.c.l.b16 %v429
    %v733 = vunpack.c.h.b16 %v429
    %v734 = vunpack.c.l.b16 %v430
    %v735 = vunpack.c.h.b16 %v430
    %v736 = vunpack.c.l.b16 %v431
    %v737 = vunpack.c.h.b16 %v431
    %v738 = vunpack.c.l.b16 %v432
    %v739 = vunpack.c.h.b16 %v432
    %v740 = vunpack.c.l.b16 %v433
    %v741 = vunpack.c.h.b16 %v433
    %v742 = vunpack.c.l.b16 %v434
    %v743 = vunpack.c.h.b16 %v434
    %v744 = vunpack.c.l.b16 %v435
    %v745 = vunpack.c.h.b16 %v435
    %v746 = vunpack.c.l.b16 %v436
    %v747 = vunpack.c.h.b16 %v436
    %v748 = vunpack.c.l.b16 %v437
    %v749 = vunpack.c.h.b16 %v437
    %v750 = vunpack.c.l.b16 %v438
    %v751 = vunpack.c.h.b16 %v438
    %v752 = vunpack.c.l.b16 %v439
    %v753 = vunpack.c.h.b16 %v439
    %v754 = vunpack.c.l.b16 %v440
    %v755 = vunpack.c.h.b16 %v440
    %v756 = vunpack.c.l.b16 %v441
    %v757 = vunpack.c.h.b16 %v441
    %v758 = vunpack.c.l.b16 %v442
    %v759 = vunpack.c.h.b16 %v442
    %v760 = vunpack.c.l.b16 %v443
    %v761 = vunpack.c.h.b16 %v443
    %v762 = vunpack.c.l.b16 %v444
    %v763 = vunpack.c.h.b16 %v444
    %v764 = vunpack.c.l.b16 %v445
    %v765 = vunpack.c.h.b16 %v445
    %v766 = vunpack.c.l.b16 %v446
    %v767 = vunpack.c.h.b16 %v446
    %v768 = vunpack.c.l.b16 %v447
    %v769 = vunpack.c.h.b16 %v447
    %v770 = vunpack.c.l.b16 %v448
    %v771 = vunpack.c.h.b16 %v448
    %v772 = vunpack.c.l.b16 %v449
    %v773 = vunpack.c.h.b16 %v449
    %v774 = vunpack.c.l.b16 %v450
    %v775 = vunpack.c.h.b16 %v450
    %v776 = vunpack.c.l.b16 %v451
    %v777 = vunpack.c.h.b16 %v451
    %v778 = vunpack.c.l.b16 %v452
    %v779 = vunpack.c.h.b16 %v452
    %v780 = vunpack.c.l.b16 %v453
    %v781 = vunpack.c.h.b16 %v453
    %v782 = vunpack.c.l.b16 %v454
    %v783 = vunpack.c.h.b16 %v454
    %v784 = vunpack.c.l.b16 %v455
    %v785 = vunpack.c.h.b16 %v455
    %v786 = vunpack.c.l.b16 %v456
    %v787 = vunpack.c.h.b16 %v456
    %v788 = vunpack.c.l.b16 %v457
    %v789 = vunpack.c.h.b16 %v457
    %v790 = vunpack.c.l.b16 %v458
    %v791 = vunpack.c.h.b16 %v458
    %v792 = vunpack.c.l.b16 %v459
    %v793 = vunpack.c.h.b16 %v459
    %v794 = vunpack.c.l.b16 %v460
    %v795 = vunpack.c.h.b16 %v460
    %v796 = vunpack.c.l.b16 %v461
    %v797 = vunpack.c.h.b16 %v461
    %v798 = vunpack.c.l.b16 %v462
    %v799 = vunpack.c.h.b16 %v462
    %v800 = vunpack.c.l.b16 %v463
    %v801 = vunpack.c.h.b16 %v463
    %v802 = vunpack.c.l.b16 %v464
    %v803 = vunpack.c.h.b16 %v464
    %v804 = vunpack.c.l.b16 %v465
    %v805 = vunpack.c.h.b16 %v465
    %v806 = vunpack.c.l.b16 %v466
    %v807 = vunpack.c.h.b16 %v466
    %v808 = vunpack.c.l.b16 %v467
    %v809 = vunpack.c.h.b16 %v467
    %v810 = vunpack.c.l.b16 %v468
    %v811 = vunpack.c.h.b16 %v468
    %v812 = vunpack.c.l.b16 %v469
    %v813 = vunpack.c.h.b16 %v469
    %v814 = vunpack.c.l.b16 %v470
    %v815 = vunpack.c.h.b16 %v470
    %v816 = vunpack.c.l.b16 %v471
    %v817 = vunpack.c.h.b16 %v471
    %v818 = vunpack.c.l.b16 %v472
    %v819 = vunpack.c.h.b16 %v472
    %v820 = vunpack.c.l.b16 %v473
    %v821 = vunpack.c.h.b16 %v473
    %v822 = vunpack.c.l.b16 %v474
    %v823 = vunpack.c.h.b16 %v474
    %v824 = vunpack.c.l.b16 %v475
    %v825 = vunpack.c.h.b16 %v475
    %v826 = vunpack.c.l.b16 %v476
    %v827 = vunpack.c.h.b16 %v476
    %v828 = vunpack.c.l.b16 %v477
    %v829 = vunpack.c.h.b16 %v477
    %v830 = vunpack.c.l.b16 %v478
    %v831 = vunpack.c.h.b16 %v478
    %v832 = vunpack.c.l.b16 %v479
    %v833 = vunpack.c.h.b16 %v479
    %v834 = vunpack.c.l.b16 %v480
    %v835 = vunpack.c.h.b16 %v480
    %v836 = vunpack.c.l.b16 %v481
    %v837 = vunpack.c.h.b16 %v481
    %v838 = vunpack.c.l.b16 %v482
    %v839 = vunpack.c.h.b16 %v482
    %v840 = vunpack.c.l.b16 %v483
    %v841 = vunpack.c.h.b16 %v483
    %v842 = vunpack.c.l.b16 %v484
    %v843 = vunpack.c.h.b16 %v484
    %v844 = vunpack.c.l.b16 %v485
    %v845 = vunpack.c.h.b16 %v485
    %v846 = vunpack.c.l.b16 %v486
    %v847 = vunpack.c.h.b16 %v486
    %v848 = vunpack.c.l.b16 %v487
    %v849 = vunpack.c.h.b16 %v487
    %v850 = vunpack.c.l.b16 %v488
    %v851 = vunpack.c.h.b16 %v488
    %v852 = vunpack.c.l.b16 %v489
    %v853 = vunpack.c.h.b16 %v489
    %v854 = vunpack.c.l.b16 %v490
    %v855 = vunpack.c.h.b16 %v490
    %v856 = vunpack.c.l.b16 %v491
    %v857 = vunpack.c.h.b16 %v491
    %v858 = vunpack.c.l.b16 %v492
    %v859 = vunpack.c.h.b16 %v492
    %v860 = vunpack.c.l.b16 %v493
    %v861 = vunpack.c.h.b16 %v493
    %v862 = vunpack.c.l.b16 %v494
    %v863 = vunpack.c.h.b16 %v494
    %v864 = vunpack.c.l.b16 %v495
    %v865 = vunpack.c.h.b16 %v495
    %v866 = vunpack.c.l.b16 %v496
    %v867 = vunpack.c.h.b16 %v496
    %v868 = vunpack.c.l.b16 %v497
    %v869 = vunpack.c.h.b16 %v497
    %v870 = vunpack.c.l.b16 %v498
    %v871 = vunpack.c.h.b16 %v498
    %v872 = vunpack.c.l.b16 %v499
    %v873 = vunpack.c.h.b16 %v499
    %v874 = vunpack.c.l.b16 %v500
    %v875 = vunpack.c.h.b16 %v500
    %v876 = vunpack.c.l.b16 %v501
    %v877 = vunpack.c.h.b16 %v501
    %v878 = vunpack.c.l.b16 %v502
    %v879 = vunpack.c.h.b16 %v502
    %v880 = vunpack.c.l.b16 %v503
    %v881 = vunpack.c.h.b16 %v503
    %v882 = vunpack.c.l.b16 %v504
    %v883 = vunpack.c.h.b16 %v504
    %v884 = vunpack.c.l.b16 %v505
    %v885 = vunpack.c.h.b16 %v505
    %v886 = vunpack.c.l.b16 %v506
    %v887 = vunpack.c.h.b16 %v506
    %v888 = vunpack.c.l.b16 %v507
    %v889 = vunpack.c.h.b16 %v507
    %v890 = vunpack.c.l.b16 %v508
    %v891 = vunpack.c.h.b16 %v508
    %v892 = vunpack.c.l.b16 %v509
    %v893 = vunpack.c.h.b16 %v509
    %v894 = vunpack.c.l.b16 %v510
    %v895 = vunpack.c.h.b16 %v510
    %v896 = vunpack.c.l.b16 %v511
    %v897 = vunpack.c.h.b16 %v511
    %v898 = vunpack.c.l.b16 %v512
    %v899 = vunpack.c.h.b16 %v512
    %v900 = vunpack.c.l.b16 %v513
    %v901 = vunpack.c.h.b16 %v513
    %v902 = vunpack.c.l.b16 %v514
    %v903 = vunpack.c.h.b16 %v514
    %v904 = vunpack.c.l.b16 %v515
    %v905 = vunpack.c.h.b16 %v515
    %v906 = vunpack.c.l.b16 %v516
    %v907 = vunpack.c.h.b16 %v516
    %v908 = vunpack.c.l.b16 %v517
    %v909 = vunpack.c.h.b16 %v517
    %v910 = vunpack.c.l.b16 %v518
    %v911 = vunpack.c.h.b16 %v518
    %v912 = vunpack.c.l.b16 %v519
    %v913 = vunpack.c.h.b16 %v519
    %v914 = vunpack.c.l.b16 %v520
    %v915 = vunpack.c.h.b16 %v520
    %v916 = vunpack.c.l.b16 %v521
    %v917 = vunpack.c.h.b16 %v521
    %v918 = vpack.c.b16 %v664, %v662
    %v919 = vpack.c.b16 %v665, %v663
    %v920 = vpack.c.b16 %v668, %v666
    %v921 = vpack.c.b16 %v669, %v667
    %v922 = vpack.c.b16 %v672, %v670
    %v923 = vpack.c.b16 %v673, %v671
    %v924 = vpack.c.b16 %v676, %v674
    %v925 = vpack.c.b16 %v677, %v675
    %v926 = vpack.c.b16 %v680, %v678
    %v927 = vpack.c.b16 %v681, %v679
    %v928 = vpack.c.b16 %v684, %v682
    %v929 = vpack.c.b16 %v685, %v683
    %v930 = vpack.c.b16 %v688, %v686
    %v931 = vpack.c.b16 %v689, %v687
    %v932 = vpack.c.b16 %v692, %v690
    %v933 = vpack.c.b16 %v693, %v691
    %v934 = vpack.c.b16 %v696, %v694
    %v935 = vpack.c.b16 %v697, %v695
    %v936 = vpack.c.b16 %v700, %v698
    %v937 = vpack.c.b16 %v701, %v699
    %v938 = vpack.c.b16 %v704, %v702
    %v939 = vpack.c.b16 %v705, %v703
    %v940 = vpack.c.b16 %v708, %v706
    %v941 = vpack.c.b16 %v709, %v707
    %v942 = vpack.c.b16 %v712, %v710
    %v943 = vpack.c.b16 %v713, %v711
    %v944 = vpack.c.b16 %v716, %v714
    %v945 = vpack.c.b16 %v717, %v715
    %v946 = vpack.c.b16 %v720, %v718
    %v947 = vpack.c.b16 %v721, %v719
    %v948 = vpack.c.b16 %v724, %v722
    %v949 = vpack.c.b16 %v725, %v723
    %v950 = vpack.c.b16 %v728, %v726
    %v951 = vpack.c.b16 %v729, %v727
    %v952 = vpack.c.b16 %v732, %v730
    %v953 = vpack.c.b16 %v733, %v731
    %v954 = vpack.c.b16 %v736, %v734
    %v955 = vpack.c.b16 %v737, %v735
    %v956 = vpack.c.b16 %v740, %v738
    %v957 = vpack.c.b16 %v741, %v739
    %v958 = vpack.c.b16 %v744, %v742
    %v959 = vpack.c.b16 %v745, %v743
    %v960 = vpack.c.b16 %v748, %v746
    %v961 = vpack.c.b16 %v749, %v747
    %v962 = vpack.c.b16 %v752, %v750
    %v963 = vpack.c.b16 %v753, %v751
    %v964 = vpack.c.b16 %v756, %v754
    %v965 = vpack.c.b16 %v757, %v755
    %v966 = vpack.c.b16 %v760, %v758
    %v967 = vpack.c.b16 %v761, %v759
    %v968 = vpack.c.b16 %v764, %v762
    %v969 = vpack.c.b16 %v765, %v763
    %v970 = vpack.c.b16 %v768, %v766
    %v971 = vpack.c.b16 %v769, %v767
    %v972 = vpack.c.b16 %v772, %v770
    %v973 = vpack.c.b16 %v773, %v771
    %v974 = vpack.c.b16 %v776, %v774
    %v975 = vpack.c.b16 %v777, %v775
    %v976 = vpack.c.b16 %v780, %v778
    %v977 = vpack.c.b16 %v781, %v779
    %v978 = vpack.c.b16 %v784, %v782
    %v979 = vpack.c.b16 %v785, %v783
    %v980 = vpack.c.b16 %v788, %v786
    %v981 = vpack.c.b16 %v789, %v787
    %v982 = vpack.c.b16 %v792, %v790
    %v983 = vpack.c.b16 %v793, %v791
    %v984 = vpack.c.b16 %v796, %v794
    %v985 = vpack.c.b16 %v797, %v795
    %v986 = vpack.c.b16 %v800, %v798
    %v987 = vpack.c.b16 %v801, %v799
    %v988 = vpack.c.b16 %v804, %v802
    %v989 = vpack.c.b16 %v805, %v803
    %v990 = vpack.c.b16 %v808, %v806
    %v991 = vpack.c.b16 %v809, %v807
    %v992 = vpack.c.b16 %v812, %v810
    %v993 = vpack.c.b16 %v813, %v811
    %v994 = vpack.c.b16 %v816, %v814
    %v995 = vpack.c.b16 %v817, %v815
    %v996 = vpack.c.b16 %v820, %v818
    %v997 = vpack.c.b16 %v821, %v819
    %v998 = vpack.c.b16 %v824, %v822
    %v999 = vpack.c.b16 %v825, %v823
    %v1000 = vpack.c.b16 %v828, %v826
    %v1001 = vpack.c.b16 %v829, %v827
    %v1002 = vpack.c.b16 %v832, %v830
    %v1003 = vpack.c.b16 %v833, %v831
    %v1004 = vpack.c.b16 %v836, %v834
    %v1005 = vpack.c.b16 %v837, %v835
    %v1006 = vpack.c.b16 %v840, %v838
    %v1007 = vpack.c.b16 %v841, %v839
    %v1008 = vpack.c.b16 %v844, %v842
    %v1009 = vpack.c.b16 %v845, %v843
    %v1010 = vpack.c.b16 %v848, %v846
    %v1011 = vpack.c.b16 %v849, %v847
    %v1012 = vpack.c.b16 %v852, %v850
    %v1013 = vpack.c.b16 %v853, %v851
    %v1014 = vpack.c.b16 %v856, %v854
    %v1015 = vpack.c.b16 %v857, %v855
    %v1016 = vpack.c.b16 %v860, %v858
    %v1017 = vpack.c.b16 %v861, %v859
    %v1018 = vpack.c.b16 %v864, %v862
    %v1019 = vpack.c.b16 %v865, %v863
    %v1020 = vpack.c.b16 %v868, %v866
    %v1021 = vpack.c.b16 %v869, %v867
    %v1022 = vpack.c.b16 %v872, %v870
    %v1023 = vpack.c.b16 %v873, %v871
    %v1024 = vpack.c.b16 %v876, %v874
    %v1025 = vpack.c.b16 %v877, %v875
    %v1026 = vpack.c.b16 %v880, %v878
    %v1027 = vpack.c.b16 %v881, %v879
    %v1028 = vpack.c.b16 %v884, %v882
    %v1029 = vpack.c.b16 %v885, %v883
    %v1030 = vpack.c.b16 %v888, %v886
    %v1031 = vpack.c.b16 %v889, %v887
    %v1032 = vpack.c.b16 %v892, %v890
    %v1033 = vpack.c.b16 %v893, %v891
    %v1034 = vpack.c.b16 %v896, %v894
    %v1035 = vpack.c.b16 %v897, %v895
    %v1036 = vpack.c.b16 %v900, %v898
    %v1037 = vpack.c.b16 %v901, %v899
    %v1038 = vpack.c.b16 %v904, %v902
    %v1039 = vpack.c.b16 %v905, %v903
    %v1040 = vpack.c.b16 %v908, %v906
    %v1041 = vpack.c.b16 %v909, %v907
    %v1042 = vpack.c.b16 %v912, %v910
    %v1043 = vpack.c.b16 %v913, %v911
    %v1044 = vpack.c.b16 %v916, %v914
    %v1045 = vpack.c.b16 %v917, %v915
    %1174 = vmatprep.subr.bf16.mxu0 %v933
    %1175 = vmatpush1.bf16.msra.mxu0 %v932
    %1176 = vmatprep.subr.bf16.mxu0 %v931
    %1177 = vmatpush1.bf16.msra.mxu0 %v930
    %1178 = vmatprep.subr.bf16.mxu0 %v929
    %1179 = vmatpush1.bf16.msra.mxu0 %v928
    %1180 = vmatprep.subr.bf16.mxu0 %v927
    %1181 = vmatpush1.bf16.msra.mxu0 %v926
    %1182 = vmatprep.subr.bf16.mxu0 %v925
    %1183 = vmatpush1.bf16.msra.mxu0 %v924
    %1184 = vmatprep.subr.bf16.mxu0 %v923
    %1185 = vmatpush1.bf16.msra.mxu0 %v922
    %1186 = vmatprep.subr.bf16.mxu0 %v921
    %1187 = vmatpush1.bf16.msra.mxu0 %v920
    %1188 = vmatprep.subr.bf16.mxu0 %v919
    %1189 = vmatpush1.bf16.msra.mxu0 %v918
    %1190 = vmatprep.subr.bf16.mxu0 %v949
    %1191 = vmatpush2.bf16.msra.mxu0 %v948
    %1192 = vmatprep.subr.bf16.mxu0 %v947
    %1193 = vmatpush2.bf16.msra.mxu0 %v946
    %1194 = vmatprep.subr.bf16.mxu0 %v945
    %1195 = vmatpush2.bf16.msra.mxu0 %v944
    %1196 = vmatprep.subr.bf16.mxu0 %v943
    %1197 = vmatpush2.bf16.msra.mxu0 %v942
    %1198 = vmatprep.subr.bf16.mxu0 %v941
    %1199 = vmatpush2.bf16.msra.mxu0 %v940
    %1200 = vmatprep.subr.bf16.mxu0 %v939
    %1201 = vmatpush2.bf16.msra.mxu0 %v938
    %1202 = vmatprep.subr.bf16.mxu0 %v937
    %1203 = vmatpush2.bf16.msra.mxu0 %v936
    %1204 = vmatprep.subr.bf16.mxu0 %v935
    %1205 = vmatpush2.bf16.msra.mxu0 %v934
    %1206 = vmatprep.mubr.bf16.mxu0 %v387
    %1207 = vmatmul.mubr.bf16.gmra.mxu0 %v386
    %v1208 = vpop.f32.mrf.mxu0
    %v1209 = vadd.f32 %v527, %v1208
    %v1210 = vpop.f32.mrf.mxu0
    %v1211 = vadd.f32 %v531, %v1210
    %v1212 = vpop.f32.mrf.mxu0
    %v1213 = vadd.f32 %v527, %v1212
    %v1214 = vpop.f32.mrf.mxu0
    %v1215 = vadd.f32 %v531, %v1214
    %1216 = vdwg.mxu0
    %1217 = vmatprep.subr.bf16.mxu0 %v965
    %1218 = vmatpush1.bf16.msra.mxu0 %v964
    %1219 = vmatprep.subr.bf16.mxu0 %v963
    %1220 = vmatpush1.bf16.msra.mxu0 %v962
    %1221 = vmatprep.subr.bf16.mxu0 %v961
    %1222 = vmatpush1.bf16.msra.mxu0 %v960
    %1223 = vmatprep.subr.bf16.mxu0 %v959
    %1224 = vmatpush1.bf16.msra.mxu0 %v958
    %1225 = vmatprep.subr.bf16.mxu0 %v957
    %1226 = vmatpush1.bf16.msra.mxu0 %v956
    %1227 = vmatprep.subr.bf16.mxu0 %v955
    %1228 = vmatpush1.bf16.msra.mxu0 %v954
    %1229 = vmatprep.subr.bf16.mxu0 %v953
    %1230 = vmatpush1.bf16.msra.mxu0 %v952
    %1231 = vmatprep.subr.bf16.mxu0 %v951
    %1232 = vmatpush1.bf16.msra.mxu0 %v950
    %1233 = vmatprep.subr.bf16.mxu0 %v981
    %1234 = vmatpush2.bf16.msra.mxu0 %v980
    %1235 = vmatprep.subr.bf16.mxu0 %v979
    %1236 = vmatpush2.bf16.msra.mxu0 %v978
    %1237 = vmatprep.subr.bf16.mxu0 %v977
    %1238 = vmatpush2.bf16.msra.mxu0 %v976
    %1239 = vmatprep.subr.bf16.mxu0 %v975
    %1240 = vmatpush2.bf16.msra.mxu0 %v974
    %1241 = vmatprep.subr.bf16.mxu0 %v973
    %1242 = vmatpush2.bf16.msra.mxu0 %v972
    %1243 = vmatprep.subr.bf16.mxu0 %v971
    %1244 = vmatpush2.bf16.msra.mxu0 %v970
    %1245 = vmatprep.subr.bf16.mxu0 %v969
    %1246 = vmatpush2.bf16.msra.mxu0 %v968
    %1247 = vmatprep.subr.bf16.mxu0 %v967
    %1248 = vmatpush2.bf16.msra.mxu0 %v966
    %1249 = vmatprep.mubr.bf16.mxu0 %v389
    %1250 = vmatmul.mubr.bf16.gmra.mxu0 %v388
    %v1251 = vpop.f32.mrf.mxu0
    %v1252 = vadd.f32 %v1209, %v1251
    %v1253 = vpop.f32.mrf.mxu0
    %v1254 = vadd.f32 %v1211, %v1253
    %v1255 = vpop.f32.mrf.mxu0
    %v1256 = vadd.f32 %v1213, %v1255
    %v1257 = vpop.f32.mrf.mxu0
    %v1258 = vadd.f32 %v1215, %v1257
    %1259 = vdwg.mxu0
    %1260 = vmatprep.subr.bf16.mxu0 %v997
    %1261 = vmatpush1.bf16.msra.mxu0 %v996
    %1262 = vmatprep.subr.bf16.mxu0 %v995
    %1263 = vmatpush1.bf16.msra.mxu0 %v994
    %1264 = vmatprep.subr.bf16.mxu0 %v993
    %1265 = vmatpush1.bf16.msra.mxu0 %v992
    %1266 = vmatprep.subr.bf16.mxu0 %v991
    %1267 = vmatpush1.bf16.msra.mxu0 %v990
    %1268 = vmatprep.subr.bf16.mxu0 %v989
    %1269 = vmatpush1.bf16.msra.mxu0 %v988
    %1270 = vmatprep.subr.bf16.mxu0 %v987
    %1271 = vmatpush1.bf16.msra.mxu0 %v986
    %1272 = vmatprep.subr.bf16.mxu0 %v985
    %1273 = vmatpush1.bf16.msra.mxu0 %v984
    %1274 = vmatprep.subr.bf16.mxu0 %v983
    %1275 = vmatpush1.bf16.msra.mxu0 %v982
    %1276 = vmatprep.subr.bf16.mxu0 %v1013
    %1277 = vmatpush2.bf16.msra.mxu0 %v1012
    %1278 = vmatprep.subr.bf16.mxu0 %v1011
    %1279 = vmatpush2.bf16.msra.mxu0 %v1010
    %1280 = vmatprep.subr.bf16.mxu0 %v1009
    %1281 = vmatpush2.bf16.msra.mxu0 %v1008
    %1282 = vmatprep.subr.bf16.mxu0 %v1007
    %1283 = vmatpush2.bf16.msra.mxu0 %v1006
    %1284 = vmatprep.subr.bf16.mxu0 %v1005
    %1285 = vmatpush2.bf16.msra.mxu0 %v1004
    %1286 = vmatprep.subr.bf16.mxu0 %v1003
    %1287 = vmatpush2.bf16.msra.mxu0 %v1002
    %1288 = vmatprep.subr.bf16.mxu0 %v1001
    %1289 = vmatpush2.bf16.msra.mxu0 %v1000
    %1290 = vmatprep.subr.bf16.mxu0 %v999
    %1291 = vmatpush2.bf16.msra.mxu0 %v998
    %1292 = vmatprep.mubr.bf16.mxu0 %v391
    %1293 = vmatmul.mubr.bf16.gmra.mxu0 %v390
    %v1294 = vpop.f32.mrf.mxu0
    %v1295 = vadd.f32 %v1252, %v1294
    %v1296 = vpop.f32.mrf.mxu0
    %v1297 = vadd.f32 %v1254, %v1296
    %v1298 = vpop.f32.mrf.mxu0
    %v1299 = vadd.f32 %v1256, %v1298
    %v1300 = vpop.f32.mrf.mxu0
    %v1301 = vadd.f32 %v1258, %v1300
    %1302 = vdwg.mxu0
    %1303 = vmatprep.subr.bf16.mxu0 %v1029
    %1304 = vmatpush1.bf16.msra.mxu0 %v1028
    %1305 = vmatprep.subr.bf16.mxu0 %v1027
    %1306 = vmatpush1.bf16.msra.mxu0 %v1026
    %1307 = vmatprep.subr.bf16.mxu0 %v1025
    %1308 = vmatpush1.bf16.msra.mxu0 %v1024
    %1309 = vmatprep.subr.bf16.mxu0 %v1023
    %1310 = vmatpush1.bf16.msra.mxu0 %v1022
    %1311 = vmatprep.subr.bf16.mxu0 %v1021
    %1312 = vmatpush1.bf16.msra.mxu0 %v1020
    %1313 = vmatprep.subr.bf16.mxu0 %v1019
    %1314 = vmatpush1.bf16.msra.mxu0 %v1018
    %1315 = vmatprep.subr.bf16.mxu0 %v1017
    %1316 = vmatpush1.bf16.msra.mxu0 %v1016
    %1317 = vmatprep.subr.bf16.mxu0 %v1015
    %1318 = vmatpush1.bf16.msra.mxu0 %v1014
    %1319 = vmatprep.subr.bf16.mxu0 %v1045
    %1320 = vmatpush2.bf16.msra.mxu0 %v1044
    %1321 = vmatprep.subr.bf16.mxu0 %v1043
    %1322 = vmatpush2.bf16.msra.mxu0 %v1042
    %1323 = vmatprep.subr.bf16.mxu0 %v1041
    %1324 = vmatpush2.bf16.msra.mxu0 %v1040
    %1325 = vmatprep.subr.bf16.mxu0 %v1039
    %1326 = vmatpush2.bf16.msra.mxu0 %v1038
    %1327 = vmatprep.subr.bf16.mxu0 %v1037
    %1328 = vmatpush2.bf16.msra.mxu0 %v1036
    %1329 = vmatprep.subr.bf16.mxu0 %v1035
    %1330 = vmatpush2.bf16.msra.mxu0 %v1034
    %1331 = vmatprep.subr.bf16.mxu0 %v1033
    %1332 = vmatpush2.bf16.msra.mxu0 %v1032
    %1333 = vmatprep.subr.bf16.mxu0 %v1031
    %1334 = vmatpush2.bf16.msra.mxu0 %v1030
    %1335 = vmatprep.mubr.bf16.mxu0 %v393
    %1336 = vmatmul.mubr.bf16.gmra.mxu0 %v392
    %v1337 = vpop.f32.mrf.mxu0
    %v1338 = vadd.f32 %v1295, %v1337
    %v1339 = vpop.f32.mrf.mxu0
    %v1340 = vadd.f32 %v1297, %v1339
    %v1341 = vpop.f32.mrf.mxu0
    %v1342 = vadd.f32 %v1299, %v1341
    %v1343 = vpop.f32.mrf.mxu0
    %v1344 = vadd.f32 %v1301, %v1343
    %1345 = vdwg.mxu0
    %v1346 = vmax.f32 %v1338, 0.0
    %v1347 = vmax.f32 %v1340, 0.0
    %v1348 = vmax.f32 %v1342, 0.0
    %v1349 = vmax.f32 %v1344, 0.0
    %v1350 = vpack.c.bf16 %v1348, %v1346
    %v1351 = vpack.c.bf16 %v1349, %v1347
    %v1352 = vld [vmem:[%s5] sm:$0xf]
    %v1353 = vld [vmem:[%s5 + $0x4] sm:$0xf]
    %v1354 = vld [vmem:[%s5 + $0x8] sm:$0xf]
    %v1355 = vld [vmem:[%s5 + $0xc] sm:$0xf]
    %v1356 = vld [vmem:[%s5 + $0x10] sm:$0xf]
    %v1357 = vld [vmem:[%s5 + $0x14] sm:$0xf]
    %v1358 = vld [vmem:[%s5 + $0x18] sm:$0xf]
    %v1359 = vld [vmem:[%s5 + $0x1c] sm:$0xf]
    %v1360 = vld [vmem:[%s5 + $0x20] sm:$0xf]
    %v1361 = vld [vmem:[%s5 + $0x24] sm:$0xf]
    %v1362 = vld [vmem:[%s5 + $0x28] sm:$0xf]
    %v1363 = vld [vmem:[%s5 + $0x2c] sm:$0xf]
    %v1364 = vld [vmem:[%s5 + $0x30] sm:$0xf]
    %v1365 = vld [vmem:[%s5 + $0x34] sm:$0xf]
    %v1366 = vld [vmem:[%s5 + $0x38] sm:$0xf]
    %v1367 = vld [vmem:[%s5 + $0x3c] sm:$0xf]
    %v1368 = vld [vmem:[%s5 + $0x40] sm:$0xf]
    %v1369 = vld [vmem:[%s5 + $0x44] sm:$0xf]
    %v1370 = vld [vmem:[%s5 + $0x48] sm:$0xf]
    %v1371 = vld [vmem:[%s5 + $0x4c] sm:$0xf]
    %v1372 = vld [vmem:[%s5 + $0x50] sm:$0xf]
    %v1373 = vld [vmem:[%s5 + $0x54] sm:$0xf]
    %v1374 = vld [vmem:[%s5 + $0x58] sm:$0xf]
    %v1375 = vld [vmem:[%s5 + $0x5c] sm:$0xf]
    %v1376 = vld [vmem:[%s5 + $0x60] sm:$0xf]
    %v1377 = vld [vmem:[%s5 + $0x64] sm:$0xf]
    %v1378 = vld [vmem:[%s5 + $0x68] sm:$0xf]
    %v1379 = vld [vmem:[%s5 + $0x6c] sm:$0xf]
    %v1380 = vld [vmem:[%s5 + $0x70] sm:$0xf]
    %v1381 = vld [vmem:[%s5 + $0x74] sm:$0xf]
    %v1382 = vld [vmem:[%s5 + $0x78] sm:$0xf]
    %v1383 = vld [vmem:[%s5 + $0x7c] sm:$0xf]
    %v1384 = vld [vmem:[%s6] sm:$0x1]
    %v1386 = vlaneseq
    %v1387 = vshrl.u32 %v1386, 7
    %v1388 = vsub.s32 0, %v1387
    %v1389 = vrot.slane %v1384, %v1388
    %v1423 = vunpack.c.l.b16 %v1352
    %v1424 = vunpack.c.l.b16 %v1353
    %v1425 = vunpack.c.l.b16 %v1354
    %v1426 = vunpack.c.l.b16 %v1355
    %v1427 = vunpack.c.l.b16 %v1356
    %v1428 = vunpack.c.l.b16 %v1357
    %v1429 = vunpack.c.l.b16 %v1358
    %v1430 = vunpack.c.l.b16 %v1359
    %v1431 = vunpack.c.l.b16 %v1360
    %v1432 = vunpack.c.l.b16 %v1361
    %v1433 = vunpack.c.l.b16 %v1362
    %v1434 = vunpack.c.l.b16 %v1363
    %v1435 = vunpack.c.l.b16 %v1364
    %v1436 = vunpack.c.l.b16 %v1365
    %v1437 = vunpack.c.l.b16 %v1366
    %v1438 = vunpack.c.l.b16 %v1367
    %v1439 = vunpack.c.l.b16 %v1368
    %v1440 = vunpack.c.l.b16 %v1369
    %v1441 = vunpack.c.l.b16 %v1370
    %v1442 = vunpack.c.l.b16 %v1371
    %v1443 = vunpack.c.l.b16 %v1372
    %v1444 = vunpack.c.l.b16 %v1373
    %v1445 = vunpack.c.l.b16 %v1374
    %v1446 = vunpack.c.l.b16 %v1375
    %v1447 = vunpack.c.l.b16 %v1376
    %v1448 = vunpack.c.l.b16 %v1377
    %v1449 = vunpack.c.l.b16 %v1378
    %v1450 = vunpack.c.l.b16 %v1379
    %v1451 = vunpack.c.l.b16 %v1380
    %v1452 = vunpack.c.l.b16 %v1381
    %v1453 = vunpack.c.l.b16 %v1382
    %v1454 = vunpack.c.l.b16 %v1383
    %v1455 = vpack.c.b16 %v1424, %v1423
    %v1456 = vpack.c.b16 %v1426, %v1425
    %v1457 = vpack.c.b16 %v1428, %v1427
    %v1458 = vpack.c.b16 %v1430, %v1429
    %v1459 = vpack.c.b16 %v1432, %v1431
    %v1460 = vpack.c.b16 %v1434, %v1433
    %v1461 = vpack.c.b16 %v1436, %v1435
    %v1462 = vpack.c.b16 %v1438, %v1437
    %v1463 = vpack.c.b16 %v1440, %v1439
    %v1464 = vpack.c.b16 %v1442, %v1441
    %v1465 = vpack.c.b16 %v1444, %v1443
    %v1466 = vpack.c.b16 %v1446, %v1445
    %v1467 = vpack.c.b16 %v1448, %v1447
    %v1468 = vpack.c.b16 %v1450, %v1449
    %v1469 = vpack.c.b16 %v1452, %v1451
    %v1470 = vpack.c.b16 %v1454, %v1453
    %1487 = vmatprep.subr.bf16.mxu0 0
    %1488 = vmatpush1.bf16.msra.mxu0 %v1462
    %1489 = vmatprep.subr.bf16.mxu0 0
    %1490 = vmatpush1.bf16.msra.mxu0 %v1461
    %1491 = vmatprep.subr.bf16.mxu0 0
    %1492 = vmatpush1.bf16.msra.mxu0 %v1460
    %1493 = vmatprep.subr.bf16.mxu0 0
    %1494 = vmatpush1.bf16.msra.mxu0 %v1459
    %1495 = vmatprep.subr.bf16.mxu0 0
    %1496 = vmatpush1.bf16.msra.mxu0 %v1458
    %1497 = vmatprep.subr.bf16.mxu0 0
    %1498 = vmatpush1.bf16.msra.mxu0 %v1457
    %1499 = vmatprep.subr.bf16.mxu0 0
    %1500 = vmatpush1.bf16.msra.mxu0 %v1456
    %1501 = vmatprep.subr.bf16.mxu0 0
    %1502 = vmatpush1.bf16.msra.mxu0 %v1455
    %1503 = vmatprep.subr.bf16.mxu0 0
    %1504 = vmatpush2.bf16.msra.mxu0 %v1470
    %1505 = vmatprep.subr.bf16.mxu0 0
    %1506 = vmatpush2.bf16.msra.mxu0 %v1469
    %1507 = vmatprep.subr.bf16.mxu0 0
    %1508 = vmatpush2.bf16.msra.mxu0 %v1468
    %1509 = vmatprep.subr.bf16.mxu0 0
    %1510 = vmatpush2.bf16.msra.mxu0 %v1467
    %1511 = vmatprep.subr.bf16.mxu0 0
    %1512 = vmatpush2.bf16.msra.mxu0 %v1466
    %1513 = vmatprep.subr.bf16.mxu0 0
    %1514 = vmatpush2.bf16.msra.mxu0 %v1465
    %1515 = vmatprep.subr.bf16.mxu0 0
    %1516 = vmatpush2.bf16.msra.mxu0 %v1464
    %1517 = vmatprep.subr.bf16.mxu0 0
    %1518 = vmatpush2.bf16.msra.mxu0 %v1463
    %1519 = vmatprep.mubr.bf16.mxu0 %v1351
    %1520 = vmatmul.mubr.bf16.gmra.mxu0 %v1350
    %v1521 = vpop.f32.mrf.mxu0
    %v1522 = vadd.f32 %v1389, %v1521
    %v1523 = vpop.f32.mrf.mxu0
    %v1524 = vpop.f32.mrf.mxu0
    %v1525 = vadd.f32 %v1389, %v1524
    %v1526 = vpop.f32.mrf.mxu0
    %1527 = vdwg.mxu0
    %v1528 = vmax.f32 %v1522, 0.0
    %v1529 = vmax.f32 %v1525, 0.0
    %v1530 = vld [vmem:[%s7] sm:$0x1]
    %v1532 = vlaneseq
    %v1533 = vshrl.u32 %v1532, 7
    %v1534 = vsub.s32 0, %v1533
    %v1535 = vrot.slane %v1530, %v1534
    %v1537 = vmul.f32 %v1528, %v1535
    %v1538 = vmul.f32 %v1529, %v1535
    %vm1539 = vcmask 523264
    %v1540 = vsel %vm1539, %v1537, 0.0
    %1541 = vadd.xlane.f32.xlu0 %v1540
    %v1542 = vpop.xlane.xlu0 %1541
    %v1543 = vsel %vm1539, %v1538, 0.0
    %1544 = vadd.xlane.f32.xlu0 %v1543
    %v1545 = vpop.xlane.xlu0 %1544
    %v1546 = vld [vmem:[#allocation2] sm:$0x1]
    %v1548 = vlaneseq
    %v1549 = vshrl.u32 %v1548, 7
    %v1550 = vsub.s32 0, %v1549
    %v1551 = vrot.slane %v1546, %v1550
    %v1553 = vadd.f32 %v1542, %v1551
    %v1554 = vadd.f32 %v1545, %v1551
    %vm1555 = vcmask 7168
    %1556 = vst.msk [vmem:[%s9] sm:$0xff] %vm1555, %v1553
    %1557 = vst.msk [vmem:[%s9 + $0x8] sm:$0xff] %vm1555, %v1554
    // Predicated region
    $region42: #{regression_model_forward.1} parent=1 // pred_check
      _
    $region43: #{regression_model_forward.1} parent=1 // pred_check_branch
      %1559 = sbr.rel (0) target = $region45
    $region44: #{regression_model_forward.1} parent=1 // pred_region
      _
    $region45: #{regression_model_forward.1} parent=1 // pred_fallthru
      _
    // Predicated region
    $region46: #{regression_model_forward.1} parent=1 // pred_check
      _
    $region47: #{regression_model_forward.1} parent=1 // pred_check_branch
      %1561 = sbr.rel (0) target = $region49
    $region48: #{regression_model_forward.1} parent=1 // pred_region
      _
    $region49: #{regression_model_forward.1} parent=1 // pred_fallthru
      _
    %1562 = vsyncpa [#allocation4], 1

</llo_original>
